<compile_context>
chip_gen: v7x
topology: tpu7x:2x2x1
jax: 0.10.0
libtpu: 0.0.40
codegen_flags: <defaults>
</compile_context>

<pallas_src>
import jax
import jax.numpy as jnp
from jax import lax
from jax.experimental import pallas as pl
from jax.experimental.pallas import tpu as pltpu

H1, H2, OUT = 40, 10, 2


def _round_up(x, m):
    return ((x + m - 1) // m) * m


# Extended feature dims: one extra "ones" row folds the next layer's bias into
# its weight matrix; the remainder is zero padding up to a sublane multiple.
H1E = _round_up(H1 + 1, 8)   # 48: rows 0..39 real, row 40 == 1.0, rows 41..47 == 0
H2E = _round_up(H2 + 1, 8)   # 16: rows 0..9  real, row 10 == 1.0, rows 11..15 == 0


def _velo_encoder_kernel(x_ref, w1_ref, b1_ref, w2_ref, w3_ref, o_ref):
    # x_ref: (tb, IN) f32 in the caller's native (batch, features) layout.
    # Layer 1: W1 @ x^T expressed as a last-dim/last-dim contraction so no
    # transpose of x is ever materialized; result is (H1E, tb), lane-dense.
    h1 = lax.dot_general(
        w1_ref[...], x_ref[...],
        dimension_numbers=(((1,), (1,)), ((), ())),
        preferred_element_type=jnp.float32) + b1_ref[...]
    h1 = jnp.maximum(h1, 0.0)            # (H1E, tb); row H1 stays exactly 1.0
    # Layers 2 & 3: biases are pre-folded into w2/w3 via the constant-one rows,
    # so no broadcast adds are needed here (saves VALU passes, esp. on v5e).
    h2 = jnp.maximum(
        jnp.dot(w2_ref[...], h1, preferred_element_type=jnp.float32), 0.0)
    o_ref[...] = jnp.dot(
        w3_ref[...], h2, preferred_element_type=jnp.float32).astype(o_ref.dtype)


def _choose_tb(batch):
    """Generation-aware batch tile: big tiles, >=4 steps only where it helps."""
    b128 = _round_up(max(batch, 1), 128)
    try:
        kind = jax.devices()[0].device_kind.lower()
    except Exception:
        kind = ""
    if "v7" in kind:
        # 2 TensorCores/chip: aim for >=4 grid steps (>=2 per core) when the
        # batch allows it, with the largest 128-multiple tile that achieves it.
        tb = min(4096, max(128, _round_up(pl.cdiv(b128, 4), 128)))
    else:
        # Single TC (v5e/v6e): one big tile up to 4096, otherwise a few large
        # steps.  Per-step footprint (~1 MiB at tb=4096) is nowhere near VMEM.
        tb = min(4096, b128)
    return tb


def _pack_params(params):
    """Pack (fan_in, fan_out) params into kernel layout with folded biases."""
    in_size = params["w1"].shape[0]
    w1 = jnp.zeros((H1E, in_size), jnp.float32).at[:H1, :].set(
        params["w1"].astype(jnp.float32).T)
    b1 = jnp.zeros((H1E, 1), jnp.float32).at[:H1, 0].set(
        params["b1"].astype(jnp.float32).reshape(-1))
    b1 = b1.at[H1, 0].set(1.0)                       # ones row -> folds b2

    w2 = jnp.zeros((H2E, H1E), jnp.float32)
    w2 = w2.at[:H2, :H1].set(params["w2"].astype(jnp.float32).T)
    w2 = w2.at[:H2, H1].set(params["b2"].astype(jnp.float32).reshape(-1))
    w2 = w2.at[H2, H1].set(1.0)                      # ones row -> folds b3

    w3 = jnp.zeros((OUT, H2E), jnp.float32)
    w3 = w3.at[:, :H2].set(params["w3"].astype(jnp.float32).T)
    w3 = w3.at[:, H2].set(params["b3"].astype(jnp.float32).reshape(-1))
    return w1, b1, w2, w3


def velo_encoder_forward(x, params, *, tb=None):
    """x: (B, input_size) float32. params: dict of w1,b1,w2,b2,w3,b3 (see init_params)."""
    B, IN = x.shape
    if tb is None:
        tb = _choose_tb(B)
    n_tiles = pl.cdiv(B, tb)
    B_pad = n_tiles * tb

    x_in = x.astype(jnp.float32)
    if B_pad != B:
        # Fused pad; padded rows compute harmless values sliced off below.
        x_in = jnp.pad(x_in, ((0, B_pad - B), (0, 0)))

    w1, b1, w2, w3 = _pack_params(params)

    out_t = pl.pallas_call(
        _velo_encoder_kernel,
        out_shape=jax.ShapeDtypeStruct((OUT, B_pad), jnp.float32),
        grid_spec=pltpu.PrefetchScalarGridSpec(
            num_scalar_prefetch=0,
            grid=(n_tiles,),
            in_specs=[
                pl.BlockSpec((tb, IN), lambda i: (i, 0)),    # x streamed natively
                pl.BlockSpec((H1E, IN), lambda i: (0, 0)),   # weights stay resident
                pl.BlockSpec((H1E, 1), lambda i: (0, 0)),
                pl.BlockSpec((H2E, H1E), lambda i: (0, 0)),
                pl.BlockSpec((OUT, H2E), lambda i: (0, 0)),
            ],
            out_specs=pl.BlockSpec((OUT, tb), lambda i: (0, i)),
        ),
        compiler_params=pltpu.CompilerParams(
            dimension_semantics=("parallel",),
        ),
    )(x_in, w1, b1, w2, w3)

    # Tiny (2, B) relayout back to the module's (B, 2) output convention.
    return out_t[:, :B].T.astype(x.dtype)


def init_params(key, input_size):
    """Deterministic init mimicking nn.Linear's U(-1/sqrt(fan_in), 1/sqrt(fan_in)).

    Stored as w: (fan_in, fan_out), b: (1, fan_out) so the f32 reference is a
    plain x @ w + b; the wrapper packs/pads/folds for the kernel layout.
    """
    dims = [(input_size, H1), (H1, H2), (H2, OUT)]
    params = {}
    for idx, (fan_in, fan_out) in enumerate(dims, start=1):
        key, kw, kb = jax.random.split(key, 3)
        bound = 1.0 / jnp.sqrt(fan_in)
        params[f"w{idx}"] = jax.random.uniform(
            kw, (fan_in, fan_out), jnp.float32, -bound, bound)
        params[f"b{idx}"] = jax.random.uniform(
            kb, (1, fan_out), jnp.float32, -bound, bound)
    return params


def velo_encoder_ref(x, params):
    h = jnp.maximum(x @ params["w1"] + params["b1"], 0.0)
    h = jnp.maximum(h @ params["w2"] + params["b2"], 0.0)
    return h @ params["w3"] + params["b3"]


if __name__ == "__main__":
    input_size = 20
    batch = 256

    key = jax.random.PRNGKey(0)
    key, kx = jax.random.split(key)
    x = jax.random.normal(kx, (batch, input_size), jnp.float32)
    params = init_params(key, input_size)

    out = jax.block_until_ready(velo_encoder_forward(x, params))

    ref = velo_encoder_ref(x, params)
    assert out.shape == (batch, OUT)
    # Full-f32 path; small slack for MXU dot rounding on either side.
    assert jnp.allclose(out, ref, atol=1e-2, rtol=1e-2), "mismatch vs reference"

    print("KERNEL_OK")
</pallas_src>

<mosaic_0001>
module attributes {stable_mosaic.version = 11 : i64} {
  func.func @_velo_encoder_kernel(%arg0: i32, %arg1: memref<256x20xf32, #tpu.memory_space<vmem>>, %arg2: memref<48x20xf32, #tpu.memory_space<vmem>>, %arg3: memref<48x1xf32, #tpu.memory_space<vmem>>, %arg4: memref<16x48xf32, #tpu.memory_space<vmem>>, %arg5: memref<2x16xf32, #tpu.memory_space<vmem>>, %arg6: memref<2x256xf32, #tpu.memory_space<vmem>>) attributes {dimension_semantics = [#tpu.dimension_semantics<parallel>], iteration_bounds = array<i64: 1>, scalar_prefetch = 0 : i64, scratch_operands = 0 : i64, tpu.core_type = #tpu.core_type<tc>, window_params = [{transform_indices = @transform_0, window_bounds = array<i64: 256, 20>}, {pipeline_mode = #tpu.pipeline_mode<synchronous>, transform_indices = @transform_1, window_bounds = array<i64: 48, 20>}, {pipeline_mode = #tpu.pipeline_mode<synchronous>, transform_indices = @transform_2, window_bounds = array<i64: 48, 1>}, {pipeline_mode = #tpu.pipeline_mode<synchronous>, transform_indices = @transform_3, window_bounds = array<i64: 16, 48>}, {pipeline_mode = #tpu.pipeline_mode<synchronous>, transform_indices = @transform_4, window_bounds = array<i64: 2, 16>}, {transform_indices = @transform_5, window_bounds = array<i64: 2, 256>}]} {
    %c0 = arith.constant 0 : index
    %c0_0 = arith.constant 0 : index
    %0 = vector.load %arg2[%c0, %c0_0] : memref<48x20xf32, #tpu.memory_space<vmem>>, vector<48x20xf32>
    %c0_1 = arith.constant 0 : index
    %c0_2 = arith.constant 0 : index
    %1 = vector.load %arg1[%c0_1, %c0_2] : memref<256x20xf32, #tpu.memory_space<vmem>>, vector<256x20xf32>
    %cst = arith.constant dense<0.000000e+00> : vector<48x256xf32>
    %2 = tpu.matmul %0, %1, %cst {dimension_numbers = #tpu.dot_dimension_numbers<[1], [1], [0], [0], [0, 0, 1, 0], [], []>} : vector<48x20xf32>, vector<256x20xf32>, vector<48x256xf32> -> vector<48x256xf32>
    %c0_3 = arith.constant 0 : index
    %c0_4 = arith.constant 0 : index
    %3 = vector.load %arg3[%c0_3, %c0_4] : memref<48x1xf32, #tpu.memory_space<vmem>>, vector<48x1xf32>
    %4 = vector.broadcast %3 : vector<48x1xf32> to vector<48x256xf32>
    %5 = arith.addf %2, %4 : vector<48x256xf32>
    %cst_5 = arith.constant 0.000000e+00 : f32
    %6 = vector.broadcast %cst_5 : f32 to vector<48x256xf32>
    %7 = arith.maximumf %5, %6 : vector<48x256xf32>
    %c0_6 = arith.constant 0 : index
    %c0_7 = arith.constant 0 : index
    %8 = vector.load %arg4[%c0_6, %c0_7] : memref<16x48xf32, #tpu.memory_space<vmem>>, vector<16x48xf32>
    %cst_8 = arith.constant dense<0.000000e+00> : vector<16x256xf32>
    %9 = tpu.matmul %8, %7, %cst_8 {dimension_numbers = #tpu.dot_dimension_numbers<[1], [0], [0], [1], [0, 0, 1, 1], [], []>} : vector<16x48xf32>, vector<48x256xf32>, vector<16x256xf32> -> vector<16x256xf32>
    %cst_9 = arith.constant 0.000000e+00 : f32
    %10 = vector.broadcast %cst_9 : f32 to vector<16x256xf32>
    %11 = arith.maximumf %9, %10 : vector<16x256xf32>
    %c0_10 = arith.constant 0 : index
    %c0_11 = arith.constant 0 : index
    %12 = vector.load %arg5[%c0_10, %c0_11] : memref<2x16xf32, #tpu.memory_space<vmem>>, vector<2x16xf32>
    %cst_12 = arith.constant dense<0.000000e+00> : vector<2x256xf32>
    %13 = tpu.matmul %12, %11, %cst_12 {dimension_numbers = #tpu.dot_dimension_numbers<[1], [0], [0], [1], [0, 0, 1, 1], [], []>} : vector<2x16xf32>, vector<16x256xf32>, vector<2x256xf32> -> vector<2x256xf32>
    %c0_13 = arith.constant 0 : index
    %c0_14 = arith.constant 0 : index
    %14 = vector.load %arg6[%c0_13, %c0_14] : memref<2x256xf32, #tpu.memory_space<vmem>>, vector<2x256xf32>
    tpu.vector_store %arg6[%c0_13, %c0_14], %13 {strides = array<i32>} : memref<2x256xf32, #tpu.memory_space<vmem>>, vector<2x256xf32>,
    return
  }
  func.func @transform_0(%arg0: i32) -> (i32, i32) {
    %c0_i32 = arith.constant 0 : i32
    %c0_i32_0 = arith.constant 0 : i32
    return %arg0, %c0_i32 : i32, i32
  }
  func.func @transform_1(%arg0: i32) -> (i32, i32) {
    %c0_i32 = arith.constant 0 : i32
    %c0_i32_0 = arith.constant 0 : i32
    %c0_i32_1 = arith.constant 0 : i32
    return %c0_i32, %c0_i32_0 : i32, i32
  }
  func.func @transform_2(%arg0: i32) -> (i32, i32) {
    %c0_i32 = arith.constant 0 : i32
    %c0_i32_0 = arith.constant 0 : i32
    %c0_i32_1 = arith.constant 0 : i32
    return %c0_i32, %c0_i32_0 : i32, i32
  }
  func.func @transform_3(%arg0: i32) -> (i32, i32) {
    %c0_i32 = arith.constant 0 : i32
    %c0_i32_0 = arith.constant 0 : i32
    %c0_i32_1 = arith.constant 0 : i32
    return %c0_i32, %c0_i32_0 : i32, i32
  }
  func.func @transform_4(%arg0: i32) -> (i32, i32) {
    %c0_i32 = arith.constant 0 : i32
    %c0_i32_0 = arith.constant 0 : i32
    %c0_i32_1 = arith.constant 0 : i32
    return %c0_i32, %c0_i32_0 : i32, i32
  }
  func.func @transform_5(%arg0: i32) -> (i32, i32) {
    %c0_i32 = arith.constant 0 : i32
    %c0_i32_0 = arith.constant 0 : i32
    return %c0_i32, %arg0 : i32, i32
  }
}

</mosaic_0001>

<llo_original>
// kernel: tpu_custom_call.1
$region0: #{tpu_custom_call.1}
  #allocation0 [shape = 'u32[]', space=smem, size = 0x4, offset = 0x4, fixed_abs, tag = 'smem constant byte address 0x4 - core index']
  #allocation1 [shape = 'u32[144,128]{1,0:T(1,128)}', space=vmem, size = 0x12000, scoped, tag = 'internal scratch']
  %s0 = inlined_call_operand.vmem [shape: f32[256,20], index: 0, kind: input, shape index: {}]
  %s1 = inlined_call_operand.vmem [shape: f32[48,20], index: 1, kind: input, shape index: {}]
  %s2 = inlined_call_operand.vmem [shape: f32[48,1], index: 2, kind: input, shape index: {}]
  %s3 = inlined_call_operand.vmem [shape: f32[16,48], index: 3, kind: input, shape index: {}]
  %s4 = inlined_call_operand.vmem [shape: f32[2,16], index: 4, kind: input, shape index: {}]
  %s5 = inlined_call_operand.hbm [shape: f32[2,256], index: 5, kind: output, shape index: {}]
  %s6 = sld [smem:[#allocation0]]
  $region30: #{tpu_custom_call.1} parent=0
    _
  %s8 = ssub.s32 1, %s6
  %s9 = scalar_select 0, %s8, %s6
  $region1: #{tpu_custom_call.1} parent=0
    #allocation2 [shape = 'u8[2048]{0}', space=vmem, size = 0x800, scoped, tag = 'output window, operand 0, single buffered']
    #allocation3 [shape = 's32[1]{0}', space=sflag, size = 0x4, scoped, tag = 'scoped memory for tpu_custom_call.1']
    %10 = vsyncpa [#allocation3], 0
    // Predicated region
    $region2: #{tpu_custom_call.1} parent=1 // pred_check
      _
    $region3: #{tpu_custom_call.1} parent=1 // pred_check_branch
      %12 = sbr.rel (0) target = $region5
    $region4: #{tpu_custom_call.1} parent=1 // pred_region
      _
    $region5: #{tpu_custom_call.1} parent=1 // pred_fallthru
      _
    // Predicated region
    $region6: #{tpu_custom_call.1} parent=1 // pred_check
      _
    $region7: #{tpu_custom_call.1} parent=1 // pred_check_branch
      %14 = sbr.rel (0) target = $region9
    $region8: #{tpu_custom_call.1} parent=1 // pred_region
      _
    $region9: #{tpu_custom_call.1} parent=1 // pred_fallthru
      _
    // Predicated region
    $region10: #{tpu_custom_call.1} parent=1 // pred_check
      _
    $region11: #{tpu_custom_call.1} parent=1 // pred_check_branch
      %16 = sbr.rel (0) target = $region13
    $region12: #{tpu_custom_call.1} parent=1 // pred_region
      _
    $region13: #{tpu_custom_call.1} parent=1 // pred_fallthru
      _
    // Predicated region
    $region14: #{tpu_custom_call.1} parent=1 // pred_check
      _
    $region15: #{tpu_custom_call.1} parent=1 // pred_check_branch
      %18 = sbr.rel (0) target = $region17
    $region16: #{tpu_custom_call.1} parent=1 // pred_region
      _
    $region17: #{tpu_custom_call.1} parent=1 // pred_fallthru
      _
    // Predicated region
    $region18: #{tpu_custom_call.1} parent=1 // pred_check
      _
    $region19: #{tpu_custom_call.1} parent=1 // pred_check_branch
      %20 = sbr.rel (0) target = $region21
    $region20: #{tpu_custom_call.1} parent=1 // pred_region
      _
    $region21: #{tpu_custom_call.1} parent=1 // pred_fallthru
      _
    %v21 = vld [vmem:[%s1] sm:$0xff]
    %v22 = vld [vmem:[%s1 + $0x8] sm:$0xff]
    %v23 = vld [vmem:[%s1 + $0x10] sm:$0xff]
    %v24 = vld [vmem:[%s1 + $0x18] sm:$0xff]
    %v25 = vld [vmem:[%s1 + $0x20] sm:$0xff]
    %v26 = vld [vmem:[%s1 + $0x28] sm:$0xff]
    %v27 = vld [vmem:[%s0] sm:$0xff]
    %v28 = vld [vmem:[%s0 + $0x8] sm:$0xff]
    %v29 = vld [vmem:[%s0 + $0x10] sm:$0xff]
    %v30 = vld [vmem:[%s0 + $0x18] sm:$0xff]
    %v31 = vld [vmem:[%s0 + $0x20] sm:$0xff]
    %v32 = vld [vmem:[%s0 + $0x28] sm:$0xff]
    %v33 = vld [vmem:[%s0 + $0x30] sm:$0xff]
    %v34 = vld [vmem:[%s0 + $0x38] sm:$0xff]
    %v35 = vld [vmem:[%s0 + $0x40] sm:$0xff]
    %v36 = vld [vmem:[%s0 + $0x48] sm:$0xff]
    %v37 = vld [vmem:[%s0 + $0x50] sm:$0xff]
    %v38 = vld [vmem:[%s0 + $0x58] sm:$0xff]
    %v39 = vld [vmem:[%s0 + $0x60] sm:$0xff]
    %v40 = vld [vmem:[%s0 + $0x68] sm:$0xff]
    %v41 = vld [vmem:[%s0 + $0x70] sm:$0xff]
    %v42 = vld [vmem:[%s0 + $0x78] sm:$0xff]
    %v43 = vld [vmem:[%s0 + $0x80] sm:$0xff]
    %v44 = vld [vmem:[%s0 + $0x88] sm:$0xff]
    %v45 = vld [vmem:[%s0 + $0x90] sm:$0xff]
    %v46 = vld [vmem:[%s0 + $0x98] sm:$0xff]
    %v47 = vld [vmem:[%s0 + $0xa0] sm:$0xff]
    %v48 = vld [vmem:[%s0 + $0xa8] sm:$0xff]
    %v49 = vld [vmem:[%s0 + $0xb0] sm:$0xff]
    %v50 = vld [vmem:[%s0 + $0xb8] sm:$0xff]
    %v51 = vld [vmem:[%s0 + $0xc0] sm:$0xff]
    %v52 = vld [vmem:[%s0 + $0xc8] sm:$0xff]
    %v53 = vld [vmem:[%s0 + $0xd0] sm:$0xff]
    %v54 = vld [vmem:[%s0 + $0xd8] sm:$0xff]
    %v55 = vld [vmem:[%s0 + $0xe0] sm:$0xff]
    %v56 = vld [vmem:[%s0 + $0xe8] sm:$0xff]
    %v57 = vld [vmem:[%s0 + $0xf0] sm:$0xff]
    %v58 = vld [vmem:[%s0 + $0xf8] sm:$0xff]
    %v59 = vld [vmem:[%s2] sm:$0xff]
    %v60 = vld [vmem:[%s2 + $0x8] sm:$0xff]
    %v61 = vld [vmem:[%s2 + $0x10] sm:$0xff]
    %v62 = vld [vmem:[%s2 + $0x18] sm:$0xff]
    %v63 = vld [vmem:[%s2 + $0x20] sm:$0xff]
    %v64 = vld [vmem:[%s2 + $0x28] sm:$0xff]
    %66 = vset.pattern.permute.xlu0 0
    %67 = vperm.xlu0 %66, %v59
    %v68 = vpop.permute.xlu0 %67
    %71 = vset.pattern.permute.xlu0 0
    %72 = vperm.xlu0 %71, %v60
    %v73 = vpop.permute.xlu0 %72
    %76 = vset.pattern.permute.xlu0 0
    %77 = vperm.xlu0 %76, %v61
    %v78 = vpop.permute.xlu0 %77
    %81 = vset.pattern.permute.xlu0 0
    %82 = vperm.xlu0 %81, %v62
    %v83 = vpop.permute.xlu0 %82
    %86 = vset.pattern.permute.xlu0 0
    %87 = vperm.xlu0 %86, %v63
    %v88 = vpop.permute.xlu0 %87
    %91 = vset.pattern.permute.xlu0 0
    %92 = vperm.xlu0 %91, %v64
    %v93 = vpop.permute.xlu0 %92
    %vm95 = vcmask 162816
    %v97 = vsel %vm95, %v21, 0
    %v100 = vsel %vm95, %v22, 0
    %v103 = vsel %vm95, %v23, 0
    %v106 = vsel %vm95, %v24, 0
    %v109 = vsel %vm95, %v25, 0
    %v112 = vsel %vm95, %v26, 0
    %v115 = vsel %vm95, %v27, 0
    %v118 = vsel %vm95, %v28, 0
    %v121 = vsel %vm95, %v29, 0
    %v124 = vsel %vm95, %v30, 0
    %v127 = vsel %vm95, %v31, 0
    %v130 = vsel %vm95, %v32, 0
    %v133 = vsel %vm95, %v33, 0
    %v136 = vsel %vm95, %v34, 0
    %v139 = vsel %vm95, %v35, 0
    %v142 = vsel %vm95, %v36, 0
    %v145 = vsel %vm95, %v37, 0
    %v148 = vsel %vm95, %v38, 0
    %v151 = vsel %vm95, %v39, 0
    %v154 = vsel %vm95, %v40, 0
    %v157 = vsel %vm95, %v41, 0
    %v160 = vsel %vm95, %v42, 0
    %v163 = vsel %vm95, %v43, 0
    %v166 = vsel %vm95, %v44, 0
    %v169 = vsel %vm95, %v45, 0
    %v172 = vsel %vm95, %v46, 0
    %v175 = vsel %vm95, %v47, 0
    %v178 = vsel %vm95, %v48, 0
    %v181 = vsel %vm95, %v49, 0
    %v184 = vsel %vm95, %v50, 0
    %v187 = vsel %vm95, %v51, 0
    %v190 = vsel %vm95, %v52, 0
    %v193 = vsel %vm95, %v53, 0
    %v196 = vsel %vm95, %v54, 0
    %v199 = vsel %vm95, %v55, 0
    %v202 = vsel %vm95, %v56, 0
    %v205 = vsel %vm95, %v57, 0
    %v208 = vsel %vm95, %v58, 0
    %210 = vmatprep.subr.mxu0 0.0
    %211 = vmatpush1.xpose.msra.mxu0 %v115
    %212 = vmatprep.subr.mxu0 0.0
    %213 = vmatpush1.xpose.msra.mxu0 %v118
    %214 = vmatprep.subr.mxu0 0.0
    %215 = vmatpush1.xpose.msra.mxu0 %v121
    %216 = vmatprep.subr.mxu0 0.0
    %217 = vmatpush1.xpose.msra.mxu0 %v124
    %218 = vmatprep.subr.mxu0 0.0
    %219 = vmatpush1.xpose.msra.mxu0 %v127
    %220 = vmatprep.subr.mxu0 0.0
    %221 = vmatpush1.xpose.msra.mxu0 %v130
    %222 = vmatprep.subr.mxu0 0.0
    %223 = vmatpush1.xpose.msra.mxu0 %v133
    %224 = vmatprep.subr.mxu0 0.0
    %225 = vmatpush1.xpose.msra.mxu0 %v136
    %226 = vmatprep.subr.mxu0 0.0
    %227 = vmatpush1.xpose.msra.mxu0 %v139
    %228 = vmatprep.subr.mxu0 0.0
    %229 = vmatpush1.xpose.msra.mxu0 %v142
    %230 = vmatprep.subr.mxu0 0.0
    %231 = vmatpush1.xpose.msra.mxu0 %v145
    %232 = vmatprep.subr.mxu0 0.0
    %233 = vmatpush1.xpose.msra.mxu0 %v148
    %234 = vmatprep.subr.mxu0 0.0
    %235 = vmatpush1.xpose.msra.mxu0 %v151
    %236 = vmatprep.subr.mxu0 0.0
    %237 = vmatpush1.xpose.msra.mxu0 %v154
    %238 = vmatprep.subr.mxu0 0.0
    %239 = vmatpush1.xpose.msra.mxu0 %v157
    %240 = vmatprep.subr.mxu0 0.0
    %241 = vmatpush1.xpose.msra.mxu0 %v160
    %242 = vmatprep.subr.mxu0 0.0
    %243 = vmatpush1.xpose.msra.mxu0 %v163
    %244 = vmatprep.subr.mxu0 0.0
    %245 = vmatpush1.xpose.msra.mxu0 %v166
    %246 = vmatprep.subr.mxu0 0.0
    %247 = vmatpush1.xpose.msra.mxu0 %v169
    %248 = vmatprep.subr.mxu0 0.0
    %249 = vmatpush1.xpose.msra.mxu0 %v172
    %250 = vmatprep.subr.mxu0 0.0
    %251 = vmatpush1.xpose.msra.mxu0 %v175
    %252 = vmatprep.subr.mxu0 0.0
    %253 = vmatpush1.xpose.msra.mxu0 %v178
    %254 = vmatprep.subr.mxu0 0.0
    %255 = vmatpush1.xpose.msra.mxu0 %v181
    %256 = vmatprep.subr.mxu0 0.0
    %257 = vmatpush1.xpose.msra.mxu0 %v184
    %258 = vmatprep.subr.mxu0 0.0
    %259 = vmatpush1.xpose.msra.mxu0 %v187
    %260 = vmatprep.subr.mxu0 0.0
    %261 = vmatpush1.xpose.msra.mxu0 %v190
    %262 = vmatprep.subr.mxu0 0.0
    %263 = vmatpush1.xpose.msra.mxu0 %v193
    %264 = vmatprep.subr.mxu0 0.0
    %265 = vmatpush1.xpose.msra.mxu0 %v196
    %266 = vmatprep.subr.mxu0 0.0
    %267 = vmatpush1.xpose.msra.mxu0 %v199
    %268 = vmatprep.subr.mxu0 0.0
    %269 = vmatpush1.xpose.msra.mxu0 %v202
    %270 = vmatprep.subr.mxu0 0.0
    %271 = vmatpush1.xpose.msra.mxu0 %v205
    %272 = vmatprep.subr.mxu0 0.0
    %273 = vmatpush1.xpose.msra.mxu0 %v208
    %274 = vmatprep.mubr.f32.mxu0 0.0
    %275 = vmatmul.mubr.f32.gmra.mrb[0].mxu0 %v97
    %v276 = vpop.f32.mrb[0].mxu0
    %v277 = vadd.f32 %v68, %v276
    %v278 = vpop.f32.mrb[0].mxu0
    %v279 = vadd.f32 %v68, %v278
    %280 = vmatprep.mubr.f32.mxu0 0.0
    %281 = vmatmul.mubr.f32.gmra.mrb[0].mxu0 %v100
    %v282 = vpop.f32.mrb[0].mxu0
    %v283 = vadd.f32 %v73, %v282
    %v284 = vpop.f32.mrb[0].mxu0
    %v285 = vadd.f32 %v73, %v284
    %286 = vmatprep.mubr.f32.mxu0 0.0
    %287 = vmatmul.mubr.f32.gmra.mrb[0].mxu0 %v103
    %v288 = vpop.f32.mrb[0].mxu0
    %v289 = vadd.f32 %v78, %v288
    %v290 = vpop.f32.mrb[0].mxu0
    %v291 = vadd.f32 %v78, %v290
    %292 = vmatprep.mubr.f32.mxu0 0.0
    %293 = vmatmul.mubr.f32.gmra.mrb[0].mxu0 %v106
    %v294 = vpop.f32.mrb[0].mxu0
    %v295 = vadd.f32 %v83, %v294
    %v296 = vpop.f32.mrb[0].mxu0
    %v297 = vadd.f32 %v83, %v296
    %298 = vmatprep.mubr.f32.mxu0 0.0
    %299 = vmatmul.mubr.f32.gmra.mrb[0].mxu0 %v109
    %v300 = vpop.f32.mrb[0].mxu0
    %v301 = vadd.f32 %v88, %v300
    %v302 = vpop.f32.mrb[0].mxu0
    %v303 = vadd.f32 %v88, %v302
    %304 = vmatprep.mubr.f32.mxu0 0.0
    %305 = vmatmul.mubr.f32.gmra.mrb[0].mxu0 %v112
    %v306 = vpop.f32.mrb[0].mxu0
    %v307 = vadd.f32 %v93, %v306
    %v308 = vpop.f32.mrb[0].mxu0
    %v309 = vadd.f32 %v93, %v308
    %310 = vdwg.mxu0
    %v311 = vmax.f32 %v277, 0.0
    %v312 = vmax.f32 %v279, 0.0
    %v313 = vmax.f32 %v283, 0.0
    %v314 = vmax.f32 %v285, 0.0
    %v315 = vmax.f32 %v289, 0.0
    %v316 = vmax.f32 %v291, 0.0
    %v317 = vmax.f32 %v295, 0.0
    %v318 = vmax.f32 %v297, 0.0
    %v319 = vmax.f32 %v301, 0.0
    %v320 = vmax.f32 %v303, 0.0
    %v321 = vmax.f32 %v307, 0.0
    %v322 = vmax.f32 %v309, 0.0
    %v323 = vld [vmem:[%s3] sm:$0xff]
    %v324 = vld [vmem:[%s3 + $0x8] sm:$0xff]
    %vm325 = vcmask 392192
    %v327 = vsel %vm325, %v323, 0
    %v330 = vsel %vm325, %v324, 0
    %332 = vmatprep.subr.mxu0 %v312
    %333 = vmatpush1.msra.mxu0 %v311
    %334 = vmatprep.subr.mxu0 %v314
    %335 = vmatpush1.msra.mxu0 %v313
    %336 = vmatprep.subr.mxu0 %v316
    %337 = vmatpush1.msra.mxu0 %v315
    %338 = vmatprep.subr.mxu0 %v318
    %339 = vmatpush1.msra.mxu0 %v317
    %340 = vmatprep.subr.mxu0 %v320
    %341 = vmatpush1.msra.mxu0 %v319
    %342 = vmatprep.subr.mxu0 %v322
    %343 = vmatpush1.msra.mxu0 %v321
    %344 = vmatprep.subr.mxu0 0.0
    %345 = vmatpush1.msra.mxu0 0.0
    %346 = vmatprep.subr.mxu0 0.0
    %347 = vmatpush1.msra.mxu0 0.0
    %348 = vmatprep.subr.mxu0 0.0
    %349 = vmatpush1.msra.mxu0 0.0
    %350 = vmatprep.subr.mxu0 0.0
    %351 = vmatpush1.msra.mxu0 0.0
    %352 = vmatprep.subr.mxu0 0.0
    %353 = vmatpush1.msra.mxu0 0.0
    %354 = vmatprep.subr.mxu0 0.0
    %355 = vmatpush1.msra.mxu0 0.0
    %356 = vmatprep.subr.mxu0 0.0
    %357 = vmatpush1.msra.mxu0 0.0
    %358 = vmatprep.subr.mxu0 0.0
    %359 = vmatpush1.msra.mxu0 0.0
    %360 = vmatprep.subr.mxu0 0.0
    %361 = vmatpush1.msra.mxu0 0.0
    %362 = vmatprep.subr.mxu0 0.0
    %363 = vmatpush1.msra.mxu0 0.0
    %364 = vmatprep.subr.mxu0 0.0
    %365 = vmatpush1.msra.mxu0 0.0
    %366 = vmatprep.subr.mxu0 0.0
    %367 = vmatpush1.msra.mxu0 0.0
    %368 = vmatprep.subr.mxu0 0.0
    %369 = vmatpush1.msra.mxu0 0.0
    %370 = vmatprep.subr.mxu0 0.0
    %371 = vmatpush1.msra.mxu0 0.0
    %372 = vmatprep.subr.mxu0 0.0
    %373 = vmatpush1.msra.mxu0 0.0
    %374 = vmatprep.subr.mxu0 0.0
    %375 = vmatpush1.msra.mxu0 0.0
    %376 = vmatprep.subr.mxu0 0.0
    %377 = vmatpush1.msra.mxu0 0.0
    %378 = vmatprep.subr.mxu0 0.0
    %379 = vmatpush1.msra.mxu0 0.0
    %380 = vmatprep.subr.mxu0 0.0
    %381 = vmatpush1.msra.mxu0 0.0
    %382 = vmatprep.subr.mxu0 0.0
    %383 = vmatpush1.msra.mxu0 0.0
    %384 = vmatprep.subr.mxu0 0.0
    %385 = vmatpush1.msra.mxu0 0.0
    %386 = vmatprep.subr.mxu0 0.0
    %387 = vmatpush1.msra.mxu0 0.0
    %388 = vmatprep.subr.mxu0 0.0
    %389 = vmatpush1.msra.mxu0 0.0
    %390 = vmatprep.subr.mxu0 0.0
    %391 = vmatpush1.msra.mxu0 0.0
    %392 = vmatprep.subr.mxu0 0.0
    %393 = vmatpush1.msra.mxu0 0.0
    %394 = vmatprep.subr.mxu0 0.0
    %395 = vmatpush1.msra.mxu0 0.0
    %396 = vmatprep.mubr.f32.mxu0 0.0
    %397 = vmatmul.mubr.f32.gmra.mrb[0].mxu0 %v327
    %v398 = vpop.f32.mrb[0].mxu0
    %v399 = vadd.f32 0.0, %v398
    %v400 = vpop.f32.mrb[0].mxu0
    %v401 = vadd.f32 0.0, %v400
    %402 = vmatprep.mubr.f32.mxu0 0.0
    %403 = vmatmul.mubr.f32.gmra.mrb[0].mxu0 %v330
    %v404 = vpop.f32.mrb[0].mxu0
    %v405 = vadd.f32 0.0, %v404
    %v406 = vpop.f32.mrb[0].mxu0
    %v407 = vadd.f32 0.0, %v406
    %408 = vdwg.mxu0
    %v409 = vmax.f32 %v399, 0.0
    %v410 = vmax.f32 %v401, 0.0
    %v411 = vmax.f32 %v405, 0.0
    %v412 = vmax.f32 %v407, 0.0
    %v413 = vld [vmem:[%s4] sm:$0x3]
    %vm414 = vcmask 130048
    %v416 = vsel %vm414, %v413, 0
    %418 = vmatprep.subr.mxu0 %v410
    %419 = vmatpush1.msra.mxu0 %v409
    %420 = vmatprep.subr.mxu0 %v412
    %421 = vmatpush1.msra.mxu0 %v411
    %422 = vmatprep.subr.mxu0 0.0
    %423 = vmatpush1.msra.mxu0 0.0
    %424 = vmatprep.subr.mxu0 0.0
    %425 = vmatpush1.msra.mxu0 0.0
    %426 = vmatprep.subr.mxu0 0.0
    %427 = vmatpush1.msra.mxu0 0.0
    %428 = vmatprep.subr.mxu0 0.0
    %429 = vmatpush1.msra.mxu0 0.0
    %430 = vmatprep.subr.mxu0 0.0
    %431 = vmatpush1.msra.mxu0 0.0
    %432 = vmatprep.subr.mxu0 0.0
    %433 = vmatpush1.msra.mxu0 0.0
    %434 = vmatprep.subr.mxu0 0.0
    %435 = vmatpush1.msra.mxu0 0.0
    %436 = vmatprep.subr.mxu0 0.0
    %437 = vmatpush1.msra.mxu0 0.0
    %438 = vmatprep.subr.mxu0 0.0
    %439 = vmatpush1.msra.mxu0 0.0
    %440 = vmatprep.subr.mxu0 0.0
    %441 = vmatpush1.msra.mxu0 0.0
    %442 = vmatprep.subr.mxu0 0.0
    %443 = vmatpush1.msra.mxu0 0.0
    %444 = vmatprep.subr.mxu0 0.0
    %445 = vmatpush1.msra.mxu0 0.0
    %446 = vmatprep.subr.mxu0 0.0
    %447 = vmatpush1.msra.mxu0 0.0
    %448 = vmatprep.subr.mxu0 0.0
    %449 = vmatpush1.msra.mxu0 0.0
    %450 = vmatprep.subr.mxu0 0.0
    %451 = vmatpush1.msra.mxu0 0.0
    %452 = vmatprep.subr.mxu0 0.0
    %453 = vmatpush1.msra.mxu0 0.0
    %454 = vmatprep.subr.mxu0 0.0
    %455 = vmatpush1.msra.mxu0 0.0
    %456 = vmatprep.subr.mxu0 0.0
    %457 = vmatpush1.msra.mxu0 0.0
    %458 = vmatprep.subr.mxu0 0.0
    %459 = vmatpush1.msra.mxu0 0.0
    %460 = vmatprep.subr.mxu0 0.0
    %461 = vmatpush1.msra.mxu0 0.0
    %462 = vmatprep.subr.mxu0 0.0
    %463 = vmatpush1.msra.mxu0 0.0
    %464 = vmatprep.subr.mxu0 0.0
    %465 = vmatpush1.msra.mxu0 0.0
    %466 = vmatprep.subr.mxu0 0.0
    %467 = vmatpush1.msra.mxu0 0.0
    %468 = vmatprep.subr.mxu0 0.0
    %469 = vmatpush1.msra.mxu0 0.0
    %470 = vmatprep.subr.mxu0 0.0
    %471 = vmatpush1.msra.mxu0 0.0
    %472 = vmatprep.subr.mxu0 0.0
    %473 = vmatpush1.msra.mxu0 0.0
    %474 = vmatprep.subr.mxu0 0.0
    %475 = vmatpush1.msra.mxu0 0.0
    %476 = vmatprep.subr.mxu0 0.0
    %477 = vmatpush1.msra.mxu0 0.0
    %478 = vmatprep.subr.mxu0 0.0
    %479 = vmatpush1.msra.mxu0 0.0
    %480 = vmatprep.subr.mxu0 0.0
    %481 = vmatpush1.msra.mxu0 0.0
    %482 = vmatprep.mubr.f32.mxu0 0.0
    %483 = vmatmul.mubr.f32.gmra.mrb[0].mxu0 %v416
    %v484 = vpop.f32.mrb[0].mxu0
    %v485 = vadd.f32 0.0, %v484
    %v486 = vpop.f32.mrb[0].mxu0
    %v487 = vadd.f32 0.0, %v486
    %488 = vdwg.mxu0
    %v491 = vcombine.low %v485, %v487
    %v493 = vunpack.c.l.s4 1983009808
    %v494 = vunpack.c.0.s8 %v493
    %v495 = vlaneseq
    %v496 = vshrl.u32 %v495, 7
    %v497 = vsub.s32 %v494, %v496
    %v498 = vrot.slane %v491, %v497
    %500 = vst [vmem:[#allocation2] sm:$0xf] %v498
    // Predicated region
    $region22: #{tpu_custom_call.1} parent=1 // pred_check
      _
    $region23: #{tpu_custom_call.1} parent=1 // pred_check_branch
      %502 = sbr.rel (0) target = $region25
    $region24: #{tpu_custom_call.1} parent=1 // pred_region
      %s504 = ssub.s32 64, 64
      %505 = vsyncadd [#allocation3], %s504
      %s507 = sshll.u32 [#allocation2], 4
      %s508 = int_to_ptr.vmem [resolvable:$true] %s507
      %510 = dma.vmem_to_hbm [thread:$0]  %s508, 64, %s5, [#allocation3]
    $region25: #{tpu_custom_call.1} parent=1 // pred_fallthru
      _
    // Predicated region
    $region26: #{tpu_custom_call.1} parent=1 // pred_check
      _
    $region27: #{tpu_custom_call.1} parent=1 // pred_check_branch
      %512 = sbr.rel (0) target = $region29
    $region28: #{tpu_custom_call.1} parent=1 // pred_region
      %513 = dma.done [#allocation3], 64
    $region29: #{tpu_custom_call.1} parent=1 // pred_fallthru
      _
    %514 = vsyncpa [#allocation3], 1

</llo_original>
